<compile_context>
chip_gen: v5e
topology: v5e:2x2
jax: 0.10.0
libtpu: 0.0.40
codegen_flags: <defaults>
</compile_context>

<pallas_src>
import functools
import math

import jax
import jax.numpy as jnp
from jax.experimental import pallas as pl
from jax.experimental.pallas import tpu as pltpu


def _round_up(a, m):
    return (a + m - 1) // m * m


# ----------------------------------------------------------------------------
# Pallas kernel 1: per-point MLP   y = ReLU(x @ W_fold + b_fold)
#   (BatchNorm1d folded into W/b in the wrapper, eval mode)
# ----------------------------------------------------------------------------
def _mlp_kernel(x_ref, w_ref, b_ref, y_ref):
    # x, w already bf16 (pre-cast in the wrapper); accumulate in f32 on the MXU,
    # bias/ReLU in f32 so the same code is valid on v5e (no bf16 VPU).
    z = jnp.dot(x_ref[...], w_ref[...], preferred_element_type=jnp.float32)
    y_ref[...] = jnp.maximum(z + b_ref[...], 0.0)


def mlp_pallas(x_bf16, w_bf16, b_f32, *, tile_n):
    """x: [N_pad, Cin_pad] bf16, w: [Cin_pad, C_pad] bf16, b: [1, C_pad] f32."""
    n_pad, cin_pad = x_bf16.shape
    c_pad = w_bf16.shape[1]
    grid = (n_pad // tile_n,)
    # Explicit scoped-VMEM budget (double-buffered tiles + headroom).
    vmem_need = (2 * tile_n * cin_pad * 2 + 2 * cin_pad * c_pad * 2 +
                 2 * c_pad * 4 + 2 * tile_n * c_pad * 4)
    vmem_limit = int(min(56 << 20, max(16 << 20, vmem_need + (4 << 20))))
    return pl.pallas_call(
        _mlp_kernel,
        out_shape=jax.ShapeDtypeStruct((n_pad, c_pad), jnp.float32),
        grid_spec=pltpu.PrefetchScalarGridSpec(
            num_scalar_prefetch=0,
            grid=grid,
            in_specs=[
                pl.BlockSpec((tile_n, cin_pad), lambda i: (i, 0)),
                pl.BlockSpec((cin_pad, c_pad), lambda i: (0, 0)),   # constant block
                pl.BlockSpec((1, c_pad), lambda i: (0, 0)),         # constant block
            ],
            out_specs=pl.BlockSpec((tile_n, c_pad), lambda i: (i, 0)),
        ),
        compiler_params=pltpu.CompilerParams(
            dimension_semantics=("parallel",),
            vmem_limit_bytes=vmem_limit),
    )(x_bf16, w_bf16, b_f32)


# ----------------------------------------------------------------------------
# Pallas kernel 2: kNN gather + streaming max aggregation (scatter_max)
#   neighbor indices live in SMEM (scalar prefetch); the MLP output stays
#   VMEM-resident (constant block index -> fetched once) and is gathered
#   8 output rows at a time into a full-vreg running max with identity 0.
# ----------------------------------------------------------------------------
_ROWS_PER_GROUP = 8   # one full f32 vreg of sublanes per accumulator / store


def _knn_max_kernel(nidx_ref, y_ref, out_ref, *, k):
    # nidx_ref: SMEM [S_pad * k] int32   (flattened neighbor indices)
    # y_ref:    VMEM [N_pad, C_pad] f32  (full MLP output)
    # out_ref:  VMEM [tile_s, C_pad] f32
    i = pl.program_id(0)
    tile_s, c_pad = out_ref.shape
    n_groups = tile_s // _ROWS_PER_GROUP

    # Hoisted accumulator init (identity 0: messages are ReLU non-negative).
    acc_init = jnp.zeros((_ROWS_PER_GROUP, c_pad), jnp.float32)

    def group_body(g, carry):
        base = (i * tile_s + g * _ROWS_PER_GROUP) * k

        def neigh_body(j, acc):
            # Gather the j-th neighbor row of each of the 8 outputs in this
            # group, stack them into one full (8, C_pad) vreg, and fold into
            # the running max at full VALU width.
            rows = [y_ref[pl.ds(nidx_ref[base + r * k + j], 1), :]
                    for r in range(_ROWS_PER_GROUP)]
            return jnp.maximum(acc, jnp.concatenate(rows, axis=0))

        acc = jax.lax.fori_loop(0, k, neigh_body, acc_init, unroll=True)
        row0 = pl.multiple_of(g * _ROWS_PER_GROUP, _ROWS_PER_GROUP)
        out_ref[pl.ds(row0, _ROWS_PER_GROUP), :] = acc   # unmasked 8-row store
        return carry

    jax.lax.fori_loop(0, n_groups, group_body, 0)


def knn_max_pallas(nidx_flat, y, *, k, tile_s, s_pad):
    n_pad, c_pad = y.shape
    grid = (s_pad // tile_s,)
    # Explicit scoped-VMEM budget: resident y (double-buffered by the pipeline)
    # plus the output tile buffers, with headroom; capped so it stays legal on
    # every generation (v7x has 64 MiB per TensorCore).
    y_bytes = n_pad * c_pad * 4
    out_tile_bytes = tile_s * c_pad * 4
    vmem_limit = int(min(56 << 20,
                         max(32 << 20, 2 * y_bytes + 2 * out_tile_bytes + (4 << 20))))
    return pl.pallas_call(
        functools.partial(_knn_max_kernel, k=k),
        out_shape=jax.ShapeDtypeStruct((s_pad, c_pad), jnp.float32),
        grid_spec=pltpu.PrefetchScalarGridSpec(
            num_scalar_prefetch=1,
            grid=grid,
            in_specs=[pl.BlockSpec((n_pad, c_pad), lambda i, nidx: (0, 0))],
            out_specs=pl.BlockSpec((tile_s, c_pad), lambda i, nidx: (i, 0)),
        ),
        compiler_params=pltpu.CompilerParams(
            dimension_semantics=("parallel",),
            vmem_limit_bytes=vmem_limit),
    )(nidx_flat, y)


# ----------------------------------------------------------------------------
# Plain-JAX, device-side graph construction (irregular / data-dependent glue).
# ----------------------------------------------------------------------------
def fps_equal_batches(pos, batch_size, n_per_batch, ratio):
    """Farthest point sampling, fully on device. Assumes contiguous equal-size
    batches; deterministic start at point 0 (torch_cluster random_start=False)."""
    n_sample = int(math.ceil(ratio * n_per_batch))
    pos_b = pos.reshape(batch_size, n_per_batch, pos.shape[-1])

    def one(p):
        d0 = jnp.sum((p - p[0]) ** 2, axis=-1)
        sel0 = jnp.zeros((n_sample,), jnp.int32)

        def body(t, carry):
            sel, d = carry
            nxt = jnp.argmax(d).astype(jnp.int32)
            sel = sel.at[t].set(nxt)
            d = jnp.minimum(d, jnp.sum((p - p[nxt]) ** 2, axis=-1))
            return sel, d

        sel, _ = jax.lax.fori_loop(1, n_sample, body, (sel0, d0))
        return sel

    local = jax.vmap(one)(pos_b)                                 # [B, n_sample]
    offs = (jnp.arange(batch_size, dtype=jnp.int32) * n_per_batch)[:, None]
    return (local + offs).reshape(-1)                            # global indices


def knn_same_batch(pos, batch, q_idx, k):
    """Exact k nearest neighbors of each query within its batch element
    (torch_cluster.knn semantics; distance ties broken arbitrarily)."""
    q_pos = pos[q_idx]
    q_batch = batch[q_idx]
    d2 = jnp.sum((q_pos[:, None, :] - pos[None, :, :]) ** 2, axis=-1)
    d2 = jnp.where(q_batch[:, None] == batch[None, :], d2, jnp.inf)
    neg_top, idx = jax.lax.top_k(-d2, k)
    valid = neg_top > -jnp.inf
    # Every query has >= 1 same-batch neighbor (itself); fill any missing slots
    # with the nearest neighbor (duplicates do not change the max).
    return jnp.where(valid, idx, idx[:, :1]).astype(jnp.int32)


# ----------------------------------------------------------------------------
# TransitionDown.forward equivalent
# ----------------------------------------------------------------------------
def transition_down_forward(x, pos, batch, params, *, ratio, k,
                            batch_size, n_per_batch):
    # TODO(synk): ragged (unequal-size) batches and BatchNorm1d training-mode
    # batch statistics are not modeled (BN is folded in eval mode).
    w, b, gamma, beta, run_mean, run_var, eps = params

    # 1) graph construction
    idx = fps_equal_batches(pos, batch_size, n_per_batch, ratio)   # [S]
    nidx = knn_same_batch(pos, batch, idx, k)                      # [S, k]

    # 2) fold eval-mode BatchNorm1d into the Linear; pad to TPU-friendly shapes
    scale = gamma / jnp.sqrt(run_var + eps)
    w_fold = w * scale[None, :]
    b_fold = (b - run_mean) * scale + beta
    cin, cout = w.shape
    c_pad = _round_up(cout, 128)     # lane-dense output (unmasked stores)
    cin_pad = _round_up(cin, 16)     # bf16 sublane packing only; don't chase MXU
    w_fold = jnp.pad(w_fold, ((0, cin_pad - cin), (0, c_pad - cout)))
    w_fold = w_fold.astype(jnp.bfloat16)
    b_fold = jnp.pad(b_fold, (0, c_pad - cout)).reshape(1, c_pad)
    b_fold = b_fold.astype(jnp.float32)

    # 3) pad point / sample counts to tile multiples; pre-cast x to bf16
    n = x.shape[0]
    tile_n = min(1024, _round_up(n, 16))
    n_pad = _round_up(n, tile_n)
    x_pad = jnp.pad(x, ((0, n_pad - n), (0, cin_pad - cin))).astype(jnp.bfloat16)

    s = idx.shape[0]
    # tile_s 8..256, multiple of 8, and capped so the grid has >= 2 steps when
    # possible (keeps both v7x TensorCores busy for the aggregation).
    tile_s = min(256, max(_ROWS_PER_GROUP, _round_up((s + 1) // 2, 8)))
    s_pad = _round_up(s, tile_s)
    nidx_flat = jnp.pad(nidx, ((0, s_pad - s), (0, 0))).reshape(-1)

    # 4) Pallas hot path: per-point MLP, then in-kernel kNN gather + max
    y = mlp_pallas(x_pad, w_fold, b_fold, tile_n=tile_n)           # [n_pad, c_pad]
    out = knn_max_pallas(nidx_flat, y, k=k, tile_s=tile_s, s_pad=s_pad)
    out = out[:s, :cout]
    return out, pos[idx], batch[idx]


if __name__ == "__main__":
    # Small deterministic problem: B=2 point clouds of 16 points, 4 features.
    B, N_PER, C_IN = 2, 16, 4
    C_OUT = 32
    RATIO, K_NEIGH = 0.25, 16

    key = jax.random.PRNGKey(0)
    k1, k2, k3, k4, k5, k6, k7, k8 = jax.random.split(key, 8)
    pos = jax.random.uniform(k1, (B * N_PER, 3), dtype=jnp.float32)
    x = jax.random.normal(k2, (B * N_PER, C_IN), dtype=jnp.float32)
    batch = jnp.repeat(jnp.arange(B, dtype=jnp.int32), N_PER)

    # MLP([C_IN, C_OUT]) = Linear(C_IN, C_OUT) -> BatchNorm1d(C_OUT) -> ReLU
    w = jax.random.normal(k3, (C_IN, C_OUT), jnp.float32) / math.sqrt(C_IN)
    b = 0.01 * jax.random.normal(k4, (C_OUT,), jnp.float32)
    gamma = 1.0 + 0.1 * jax.random.normal(k5, (C_OUT,), jnp.float32)
    beta = 0.05 * jax.random.normal(k6, (C_OUT,), jnp.float32)
    run_mean = 0.1 * jax.random.normal(k7, (C_OUT,), jnp.float32)
    run_var = 1.0 + 0.1 * jax.random.uniform(k8, (C_OUT,), jnp.float32)
    eps = 1e-5
    params = (w, b, gamma, beta, run_mean, run_var, eps)

    out_x, out_pos, out_batch = transition_down_forward(
        x, pos, batch, params, ratio=RATIO, k=K_NEIGH,
        batch_size=B, n_per_batch=N_PER)
    jax.block_until_ready(out_x)
    jax.block_until_ready(out_pos)
    jax.block_until_ready(out_batch)

    s_expect = B * int(math.ceil(RATIO * N_PER))
    assert out_x.shape == (s_expect, C_OUT)
    assert out_pos.shape == (s_expect, 3)
    assert out_batch.shape == (s_expect,)
    assert bool(jnp.all(jnp.isfinite(out_x)))

    # Pure-JAX reference with the same bf16 quantization of the matmul operands.
    scale = gamma / jnp.sqrt(run_var + eps)
    w_q = (w * scale[None, :]).astype(jnp.bfloat16).astype(jnp.float32)
    b_q = (b - run_mean) * scale + beta
    x_q = x.astype(jnp.bfloat16).astype(jnp.float32)
    y_full = jnp.maximum(x_q @ w_q + b_q, 0.0)
    idx_r = fps_equal_batches(pos, B, N_PER, RATIO)
    nidx_r = knn_same_batch(pos, batch, idx_r, K_NEIGH)
    ref_out = jnp.max(y_full[nidx_r], axis=1)
    assert bool(jnp.allclose(out_x, ref_out, rtol=1e-2, atol=1e-2)), \
        float(jnp.max(jnp.abs(out_x - ref_out)))

    print("KERNEL_OK")
</pallas_src>

<mosaic_0001>
module attributes {stable_mosaic.version = 11 : i64} {
  func.func @_mlp_kernel(%arg0: i32, %arg1: memref<32x16xbf16, #tpu.memory_space<vmem>>, %arg2: memref<16x128xbf16, #tpu.memory_space<vmem>>, %arg3: memref<1x128xf32, #tpu.memory_space<vmem>>, %arg4: memref<32x128xf32, #tpu.memory_space<vmem>>) attributes {dimension_semantics = [#tpu.dimension_semantics<parallel>], iteration_bounds = array<i64: 1>, scalar_prefetch = 0 : i64, scratch_operands = 0 : i64, tpu.core_type = #tpu.core_type<tc>, window_params = [{transform_indices = @transform_0, window_bounds = array<i64: 32, 16>}, {pipeline_mode = #tpu.pipeline_mode<synchronous>, transform_indices = @transform_1, window_bounds = array<i64: 16, 128>}, {pipeline_mode = #tpu.pipeline_mode<synchronous>, transform_indices = @transform_2, window_bounds = array<i64: 1, 128>}, {transform_indices = @transform_3, window_bounds = array<i64: 32, 128>}]} {
    %c0 = arith.constant 0 : index
    %c0_0 = arith.constant 0 : index
    %0 = vector.load %arg1[%c0, %c0_0] : memref<32x16xbf16, #tpu.memory_space<vmem>>, vector<32x16xbf16>
    %c0_1 = arith.constant 0 : index
    %c0_2 = arith.constant 0 : index
    %1 = vector.load %arg2[%c0_1, %c0_2] : memref<16x128xbf16, #tpu.memory_space<vmem>>, vector<16x128xbf16>
    %cst = arith.constant dense<0.000000e+00> : vector<32x128xf32>
    %2 = tpu.matmul %0, %1, %cst {dimension_numbers = #tpu.dot_dimension_numbers<[1], [0], [0], [1], [0, 0, 1, 1], [], []>} : vector<32x16xbf16>, vector<16x128xbf16>, vector<32x128xf32> -> vector<32x128xf32>
    %c0_3 = arith.constant 0 : index
    %c0_4 = arith.constant 0 : index
    %3 = vector.load %arg3[%c0_3, %c0_4] : memref<1x128xf32, #tpu.memory_space<vmem>>, vector<1x128xf32>
    %4 = vector.broadcast %3 : vector<1x128xf32> to vector<32x128xf32>
    %5 = arith.addf %2, %4 : vector<32x128xf32>
    %cst_5 = arith.constant 0.000000e+00 : f32
    %6 = vector.broadcast %cst_5 : f32 to vector<32x128xf32>
    %7 = arith.maximumf %5, %6 : vector<32x128xf32>
    %c0_6 = arith.constant 0 : index
    %c0_7 = arith.constant 0 : index
    %8 = vector.load %arg4[%c0_6, %c0_7] : memref<32x128xf32, #tpu.memory_space<vmem>>, vector<32x128xf32>
    tpu.vector_store %arg4[%c0_6, %c0_7], %7 {strides = array<i32>} : memref<32x128xf32, #tpu.memory_space<vmem>>, vector<32x128xf32>,
    return
  }
  func.func @transform_0(%arg0: i32) -> (i32, i32) {
    %c0_i32 = arith.constant 0 : i32
    %c0_i32_0 = arith.constant 0 : i32
    return %arg0, %c0_i32 : i32, i32
  }
  func.func @transform_1(%arg0: i32) -> (i32, i32) {
    %c0_i32 = arith.constant 0 : i32
    %c0_i32_0 = arith.constant 0 : i32
    %c0_i32_1 = arith.constant 0 : i32
    return %c0_i32, %c0_i32_0 : i32, i32
  }
  func.func @transform_2(%arg0: i32) -> (i32, i32) {
    %c0_i32 = arith.constant 0 : i32
    %c0_i32_0 = arith.constant 0 : i32
    %c0_i32_1 = arith.constant 0 : i32
    return %c0_i32, %c0_i32_0 : i32, i32
  }
  func.func @transform_3(%arg0: i32) -> (i32, i32) {
    %c0_i32 = arith.constant 0 : i32
    %c0_i32_0 = arith.constant 0 : i32
    return %arg0, %c0_i32 : i32, i32
  }
}

</mosaic_0001>

<llo_original>
// kernel: tpu_custom_call.1
$region0: #{tpu_custom_call.1}
  #allocation0 [shape = 'u32[]', space=smem, size = 0x4, offset = 0x4, fixed_abs, tag = 'smem constant byte address 0x4 - core index']
  #allocation1 [shape = 'u32[72,128]{1,0:T(1,128)}', space=vmem, size = 0x9000, scoped, tag = 'internal scratch']
  %s0 = inlined_call_operand.vmem [shape: bf16[32,16], index: 0, kind: input, shape index: {}]
  %s1 = inlined_call_operand.vmem [shape: bf16[16,128], index: 1, kind: input, shape index: {}]
  %s2 = inlined_call_operand.vmem [shape: f32[1,128], index: 2, kind: input, shape index: {}]
  %s3 = inlined_call_operand.hbm [shape: f32[32,128], index: 3, kind: output, shape index: {}]
  %s4 = sld [smem:[#allocation0]]
  $region22: #{tpu_custom_call.1} parent=0
    _
  %s6 = ssub.s32 1, %s4
  %s7 = scalar_select 0, %s6, %s4
  $region1: #{tpu_custom_call.1} parent=0
    #allocation2 [shape = 'u8[16384]{0}', space=vmem, size = 0x4000, scoped, tag = 'output window, operand 0, single buffered']
    #allocation3 [shape = 's32[1]{0}', space=sflag, size = 0x4, scoped, tag = 'scoped memory for tpu_custom_call.1']
    %8 = vsyncpa [#allocation3], 0
    // Predicated region
    $region2: #{tpu_custom_call.1} parent=1 // pred_check
      _
    $region3: #{tpu_custom_call.1} parent=1 // pred_check_branch
      %10 = sbr.rel (0) target = $region5
    $region4: #{tpu_custom_call.1} parent=1 // pred_region
      _
    $region5: #{tpu_custom_call.1} parent=1 // pred_fallthru
      _
    // Predicated region
    $region6: #{tpu_custom_call.1} parent=1 // pred_check
      _
    $region7: #{tpu_custom_call.1} parent=1 // pred_check_branch
      %12 = sbr.rel (0) target = $region9
    $region8: #{tpu_custom_call.1} parent=1 // pred_region
      _
    $region9: #{tpu_custom_call.1} parent=1 // pred_fallthru
      _
    // Predicated region
    $region10: #{tpu_custom_call.1} parent=1 // pred_check
      _
    $region11: #{tpu_custom_call.1} parent=1 // pred_check_branch
      %14 = sbr.rel (0) target = $region13
    $region12: #{tpu_custom_call.1} parent=1 // pred_region
      _
    $region13: #{tpu_custom_call.1} parent=1 // pred_fallthru
      _
    %v16 = vld [vmem:[%s0] sm:$0xf]
    %v17 = vld [vmem:[%s0 + $0x4] sm:$0xf]
    %v18 = vld [vmem:[%s0 + $0x8] sm:$0xf]
    %v19 = vld [vmem:[%s0 + $0xc] sm:$0xf]
    %v20 = vld [vmem:[%s1] sm:$0xf]
    %v21 = vld [vmem:[%s1 + $0x4] sm:$0xf]
    %v22 = vld [vmem:[%s2] sm:$0x1]
    %v24 = vperm.slane %v22, 0
    %v30 = vunpack.c.l.b16 %v16
    %v31 = vunpack.c.l.b16 %v17
    %v32 = vunpack.c.l.b16 %v18
    %v33 = vunpack.c.l.b16 %v19
    %v34 = vpack.c.b16 %v31, %v30
    %v35 = vpack.c.b16 %v33, %v32
    %v38 = vunpack.c.l.b16 %v20
    %v39 = vunpack.c.l.b16 %v21
    %v40 = vpack.c.b16 %v39, %v38
    %vm42 = vcmask 130048
    %v44 = vsel %vm42, %v34, 0
    %v47 = vsel %vm42, %v35, 0
    %49 = vmatpush.bf16.msra.mxu0 0
    %50 = vmatpush.bf16.msra.mxu0 0
    %51 = vmatpush.bf16.msra.mxu0 0
    %52 = vmatpush.bf16.msra.mxu0 0
    %53 = vmatpush.bf16.msra.mxu0 0
    %54 = vmatpush.bf16.msra.mxu0 0
    %55 = vmatpush.bf16.msra.mxu0 0
    %56 = vmatpush.bf16.msra.mxu0 %v40
    %57 = vmatmul.bf16.gmra.mxu0 %v44
    %v58 = vpop.f32.mrf.mxu0
    %v59 = vadd.f32 %v24, %v58
    %v60 = vpop.f32.mrf.mxu0
    %v61 = vadd.f32 %v24, %v60
    %62 = vmatmul.bf16.gmra.mxu0 %v47
    %v63 = vpop.f32.mrf.mxu0
    %v64 = vadd.f32 %v24, %v63
    %v65 = vpop.f32.mrf.mxu0
    %v66 = vadd.f32 %v24, %v65
    %67 = vdwg.mxu0
    %v68 = vmax.f32 %v59, 0.0
    %v69 = vmax.f32 %v61, 0.0
    %v70 = vmax.f32 %v64, 0.0
    %v71 = vmax.f32 %v66, 0.0
    %72 = vst [vmem:[#allocation2] sm:$0xff] %v68
    %73 = vst [vmem:[#allocation2 + $0x8] sm:$0xff] %v69
    %74 = vst [vmem:[#allocation2 + $0x10] sm:$0xff] %v70
    %75 = vst [vmem:[#allocation2 + $0x18] sm:$0xff] %v71
    // Predicated region
    $region14: #{tpu_custom_call.1} parent=1 // pred_check
      _
    $region15: #{tpu_custom_call.1} parent=1 // pred_check_branch
      %77 = sbr.rel (0) target = $region17
    $region16: #{tpu_custom_call.1} parent=1 // pred_region
      %79 = vsyncadd [#allocation3], 0
      %s80 = sshll.u32 [#allocation2], 4
      %s81 = int_to_ptr.vmem [resolvable:$true] %s80
      %s82 = sshll.u32 %s3, 4
      %s83 = int_to_ptr.hbm [resolvable:$true] %s82
      %88 = dma.vmem_to_hbm [thread:$0]  %s81, 512, %s83, [#allocation3], 128, 128, 8
    $region17: #{tpu_custom_call.1} parent=1 // pred_fallthru
      _
    // Predicated region
    $region18: #{tpu_custom_call.1} parent=1 // pred_check
      _
    $region19: #{tpu_custom_call.1} parent=1 // pred_check_branch
      %90 = sbr.rel (0) target = $region21
    $region20: #{tpu_custom_call.1} parent=1 // pred_region
      %92 = dma.done [#allocation3], 512
    $region21: #{tpu_custom_call.1} parent=1 // pred_fallthru
      _
    %93 = vsyncpa [#allocation3], 1

</llo_original>
